<compile_context>
chip_gen: v7x
topology: tpu7x:2x2x1
jax: 0.10.0
libtpu: 0.0.40
codegen_flags: <defaults>
</compile_context>

<pallas_src>
import functools
import math

import jax
import jax.numpy as jnp
from jax import lax
from jax.experimental import pallas as pl
from jax.experimental.pallas import tpu as pltpu


def _s32(v):
    """Map an unsigned 32-bit literal to the equivalent signed int32 value."""
    v &= 0xFFFFFFFF
    return v - (1 << 32) if v >= (1 << 31) else v


def _lsr(x, k):
    """Logical right shift of an int32 array by static amount k (emulated)."""
    mask = jnp.int32((1 << (32 - k)) - 1)
    return (x >> k) & mask


def _mix32(x):
    """lowbias32 avalanche hash, bit-exact on int32 (wrapping multiplies)."""
    x = x ^ _lsr(x, 16)
    x = x * jnp.int32(_s32(0x7FEB352D))
    x = x ^ _lsr(x, 15)
    x = x * jnp.int32(_s32(0x846CA68B))
    x = x ^ _lsr(x, 16)
    return x


def _to_unit(bits):
    """int32 random bits -> uniform float32 in (0, 1) from the low 24 bits."""
    u24 = (bits & jnp.int32(0x00FFFFFF)).astype(jnp.float32)
    return (u24 + jnp.float32(0.5)) * jnp.float32(1.0 / (1 << 24))


_TWO_PI = 2.0 * math.pi


def _denoise_kernel(seed_ref, x_ref, o_ref, *, noise_std, clip_noise):
    tm, lanes = x_ref.shape
    base_row = pl.program_id(0) * tm
    # Salt the per-element counter with the user seed (scalar prefetch, SMEM).
    key = seed_ref[0] * jnp.int32(_s32(0x9E3779B9)) + jnp.int32(_s32(0x7F4A7C15))

    def draw_uniform_pair(rows, cols):
        rid = lax.broadcasted_iota(jnp.int32, (rows, cols), 0)
        cid = lax.broadcasted_iota(jnp.int32, (rows, cols), 1)
        cnt = (base_row + rid) * jnp.int32(lanes) + cid   # globally unique per elem
        b1 = _mix32(cnt ^ key)
        b2 = _mix32(b1 ^ jnp.int32(_s32(0x68E31DA4)))     # chained second stream
        return _to_unit(b1), _to_unit(b2)

    def box_muller_pair(u1, u2):
        r = jnp.sqrt(jnp.float32(-2.0) * jnp.log(u1))
        theta = jnp.float32(_TWO_PI) * u2
        return r * jnp.cos(theta), r * jnp.sin(theta)

    if tm % 16 == 0:
        # Paired Box-Muller, split along sublanes: cos half fills the top
        # sublanes, sin half the bottom (8-aligned concat, no lane shuffles).
        z_cos, z_sin = box_muller_pair(*draw_uniform_pair(tm // 2, lanes))
        z = jnp.concatenate([z_cos, z_sin], axis=0)
    elif lanes % 256 == 0:
        # Paired Box-Muller, split along lanes (both halves 128-aligned).
        z_cos, z_sin = box_muller_pair(*draw_uniform_pair(tm, lanes // 2))
        z = jnp.concatenate([z_cos, z_sin], axis=1)
    else:
        # Small / unaligned tiles: plain Box-Muller over the full tile.
        u1, u2 = draw_uniform_pair(tm, lanes)
        z = jnp.sqrt(jnp.float32(-2.0) * jnp.log(u1)) * jnp.cos(
            jnp.float32(_TWO_PI) * u2)

    y = x_ref[...].astype(jnp.float32) + z * jnp.float32(noise_std)
    if clip_noise:
        y = jnp.clip(y, 0.0, 1.0)
    o_ref[...] = y.astype(o_ref.dtype)


def _pick_row_tile(rows, lanes, itemsize):
    """Row-tile so each (tm, lanes) buffer is ~<= 2 MiB and tm | rows.

    Prefers tm % 16 == 0 so the paired Box-Muller path is available.
    """
    target = max(8, (((2 << 20) // itemsize) // max(lanes, 1)) // 8 * 8)
    if rows % 8 != 0:
        return rows            # small / odd slab: single full block (valid spec)
    if rows % 16 == 0:
        tm = min(rows, max(16, target - target % 16))
        while rows % tm != 0:  # terminates at 16
            tm -= 16
        return tm
    tm = min(rows, target)
    tm -= tm % 8
    while rows % tm != 0:      # terminates at 8 since rows % 8 == 0
        tm -= 8
    return tm


def denoising_forward(x, *, noise_std, clip_noise=False, random_seed=0):
    """x: (N, C, H, W) float.  Returns x + N(0,1)*noise_std (clamped if clip_noise)."""
    n, c, h, w = x.shape
    rows, lanes = n * c, h * w
    x2d = x.reshape(rows, lanes)          # lane-dense 2-D slab

    tm = _pick_row_tile(rows, lanes, x2d.dtype.itemsize)
    grid = pl.cdiv(rows, tm)

    seed = jnp.asarray([random_seed], dtype=jnp.int32)
    kernel = functools.partial(
        _denoise_kernel, noise_std=float(noise_std), clip_noise=bool(clip_noise))

    block_bytes = tm * lanes * x2d.dtype.itemsize
    compiler_kwargs = dict(dimension_semantics=("parallel",))
    vmem_needed = 4 * block_bytes + (1 << 20)   # 2x double-buffered in + out
    if vmem_needed > (12 << 20):
        compiler_kwargs["vmem_limit_bytes"] = min(vmem_needed, 100 << 20)

    nelem = rows * lanes
    cost = pl.CostEstimate(
        flops=12 * nelem,                        # hash + Box-Muller arithmetic
        transcendentals=2 * nelem,               # log/sqrt/cos/sin (paired ~ 2/elem)
        bytes_accessed=2 * nelem * x2d.dtype.itemsize,
    )

    out2d = pl.pallas_call(
        kernel,
        out_shape=jax.ShapeDtypeStruct(x2d.shape, x2d.dtype),
        grid_spec=pltpu.PrefetchScalarGridSpec(
            num_scalar_prefetch=1,
            grid=(grid,),
            in_specs=[pl.BlockSpec((tm, lanes), lambda i, seed_ref: (i, 0))],
            out_specs=pl.BlockSpec((tm, lanes), lambda i, seed_ref: (i, 0)),
        ),
        compiler_params=pltpu.CompilerParams(**compiler_kwargs),
        cost_estimate=cost,
    )(seed, x2d)

    return out2d.reshape(n, c, h, w)


if __name__ == "__main__":
    key = jax.random.PRNGKey(0)
    noise_std = 0.1

    # Shape 1: N=2, C=4, H=W=16 -> (8, 256) slab -> lane-paired Box-Muller path.
    x = jax.random.uniform(key, (2, 4, 16, 16), dtype=jnp.float32)
    y = denoising_forward(x, noise_std=noise_std, clip_noise=False, random_seed=0)
    y = jax.block_until_ready(y)
    assert y.shape == x.shape and y.dtype == x.dtype

    y_clip = denoising_forward(x, noise_std=noise_std, clip_noise=True, random_seed=0)
    y_clip = jax.block_until_ready(y_clip)
    assert float(jnp.min(y_clip)) >= 0.0 and float(jnp.max(y_clip)) <= 1.0

    noise = y - x
    emp_std = float(jnp.std(noise))
    emp_mean = float(jnp.mean(noise))
    assert 0.5 * noise_std < emp_std < 2.0 * noise_std, emp_std
    assert abs(emp_mean) < 0.5 * noise_std, emp_mean

    # Different seeds give different noise fields.
    y2 = denoising_forward(x, noise_std=noise_std, clip_noise=False, random_seed=7)
    y2 = jax.block_until_ready(y2)
    assert not bool(jnp.allclose(y, y2))

    # Shape 2: N=2, C=8, H=W=16 -> (16, 256) slab -> sublane-paired Box-Muller path.
    xb = jax.random.uniform(jax.random.PRNGKey(1), (2, 8, 16, 16), dtype=jnp.float32)
    yb = denoising_forward(xb, noise_std=noise_std, clip_noise=False, random_seed=3)
    yb = jax.block_until_ready(yb)
    emp_std_b = float(jnp.std(yb - xb))
    assert 0.5 * noise_std < emp_std_b < 2.0 * noise_std, emp_std_b

    print("KERNEL_OK")
</pallas_src>

<mosaic_0001>
module attributes {stable_mosaic.version = 11 : i64} {
  func.func @_denoise_kernel(%arg0: i32, %arg1: memref<1xi32, #tpu.memory_space<smem>>, %arg2: memref<8x256xf32, #tpu.memory_space<vmem>>, %arg3: memref<8x256xf32, #tpu.memory_space<vmem>>) attributes {dimension_semantics = [#tpu.dimension_semantics<parallel>], iteration_bounds = array<i64: 1>, scalar_prefetch = 1 : i64, scratch_operands = 0 : i64, tpu.core_type = #tpu.core_type<tc>, window_params = [{transform_indices = @transform_0, window_bounds = array<i64: 8, 256>}, {transform_indices = @transform_1, window_bounds = array<i64: 8, 256>}]} {
    %c8_i32 = arith.constant 8 : i32
    %0 = arith.muli %arg0, %c8_i32 : i32
    %c0 = arith.constant 0 : index
    %1 = memref.load %arg1[%c0] : memref<1xi32, #tpu.memory_space<smem>>
    %c-1640531527_i32 = arith.constant -1640531527 : i32
    %2 = arith.muli %1, %c-1640531527_i32 : i32
    %c2135587861_i32 = arith.constant 2135587861 : i32
    %3 = arith.addi %2, %c2135587861_i32 : i32
    %4 = tpu.iota {dimensions = array<i32: 0>} : vector<8x128xi32>
    %5 = tpu.iota {dimensions = array<i32: 1>} : vector<8x128xi32>
    %6 = vector.broadcast %0 : i32 to vector<8x128xi32>
    %7 = arith.addi %6, %4 : vector<8x128xi32>
    %c256_i32 = arith.constant 256 : i32
    %8 = vector.broadcast %c256_i32 : i32 to vector<8x128xi32>
    %9 = arith.muli %7, %8 : vector<8x128xi32>
    %10 = arith.addi %9, %5 : vector<8x128xi32>
    %11 = vector.broadcast %3 : i32 to vector<8x128xi32>
    %12 = arith.xori %10, %11 : vector<8x128xi32>
    %c16_i32 = arith.constant 16 : i32
    %13 = vector.broadcast %c16_i32 : i32 to vector<8x128xi32>
    %14 = arith.shrsi %12, %13 : vector<8x128xi32>
    %c65535_i32 = arith.constant 65535 : i32
    %15 = vector.broadcast %c65535_i32 : i32 to vector<8x128xi32>
    %16 = arith.andi %14, %15 : vector<8x128xi32>
    %17 = arith.xori %12, %16 : vector<8x128xi32>
    %c2146121005_i32 = arith.constant 2146121005 : i32
    %18 = vector.broadcast %c2146121005_i32 : i32 to vector<8x128xi32>
    %19 = arith.muli %17, %18 : vector<8x128xi32>
    %c15_i32 = arith.constant 15 : i32
    %20 = vector.broadcast %c15_i32 : i32 to vector<8x128xi32>
    %21 = arith.shrsi %19, %20 : vector<8x128xi32>
    %c131071_i32 = arith.constant 131071 : i32
    %22 = vector.broadcast %c131071_i32 : i32 to vector<8x128xi32>
    %23 = arith.andi %21, %22 : vector<8x128xi32>
    %24 = arith.xori %19, %23 : vector<8x128xi32>
    %c-2073254261_i32 = arith.constant -2073254261 : i32
    %25 = vector.broadcast %c-2073254261_i32 : i32 to vector<8x128xi32>
    %26 = arith.muli %24, %25 : vector<8x128xi32>
    %c16_i32_0 = arith.constant 16 : i32
    %27 = vector.broadcast %c16_i32_0 : i32 to vector<8x128xi32>
    %28 = arith.shrsi %26, %27 : vector<8x128xi32>
    %c65535_i32_1 = arith.constant 65535 : i32
    %29 = vector.broadcast %c65535_i32_1 : i32 to vector<8x128xi32>
    %30 = arith.andi %28, %29 : vector<8x128xi32>
    %31 = arith.xori %26, %30 : vector<8x128xi32>
    %c1759714724_i32 = arith.constant 1759714724 : i32
    %32 = vector.broadcast %c1759714724_i32 : i32 to vector<8x128xi32>
    %33 = arith.xori %31, %32 : vector<8x128xi32>
    %c16_i32_2 = arith.constant 16 : i32
    %34 = vector.broadcast %c16_i32_2 : i32 to vector<8x128xi32>
    %35 = arith.shrsi %33, %34 : vector<8x128xi32>
    %c65535_i32_3 = arith.constant 65535 : i32
    %36 = vector.broadcast %c65535_i32_3 : i32 to vector<8x128xi32>
    %37 = arith.andi %35, %36 : vector<8x128xi32>
    %38 = arith.xori %33, %37 : vector<8x128xi32>
    %c2146121005_i32_4 = arith.constant 2146121005 : i32
    %39 = vector.broadcast %c2146121005_i32_4 : i32 to vector<8x128xi32>
    %40 = arith.muli %38, %39 : vector<8x128xi32>
    %c15_i32_5 = arith.constant 15 : i32
    %41 = vector.broadcast %c15_i32_5 : i32 to vector<8x128xi32>
    %42 = arith.shrsi %40, %41 : vector<8x128xi32>
    %c131071_i32_6 = arith.constant 131071 : i32
    %43 = vector.broadcast %c131071_i32_6 : i32 to vector<8x128xi32>
    %44 = arith.andi %42, %43 : vector<8x128xi32>
    %45 = arith.xori %40, %44 : vector<8x128xi32>
    %c-2073254261_i32_7 = arith.constant -2073254261 : i32
    %46 = vector.broadcast %c-2073254261_i32_7 : i32 to vector<8x128xi32>
    %47 = arith.muli %45, %46 : vector<8x128xi32>
    %c16_i32_8 = arith.constant 16 : i32
    %48 = vector.broadcast %c16_i32_8 : i32 to vector<8x128xi32>
    %49 = arith.shrsi %47, %48 : vector<8x128xi32>
    %c65535_i32_9 = arith.constant 65535 : i32
    %50 = vector.broadcast %c65535_i32_9 : i32 to vector<8x128xi32>
    %51 = arith.andi %49, %50 : vector<8x128xi32>
    %52 = arith.xori %47, %51 : vector<8x128xi32>
    %c16777215_i32 = arith.constant 16777215 : i32
    %53 = vector.broadcast %c16777215_i32 : i32 to vector<8x128xi32>
    %54 = arith.andi %31, %53 : vector<8x128xi32>
    %55 = arith.sitofp %54 : vector<8x128xi32> to vector<8x128xf32>
    %cst = arith.constant 5.000000e-01 : f32
    %56 = vector.broadcast %cst : f32 to vector<8x128xf32>
    %57 = arith.addf %55, %56 : vector<8x128xf32>
    %cst_10 = arith.constant 5.96046448E-8 : f32
    %58 = vector.broadcast %cst_10 : f32 to vector<8x128xf32>
    %59 = arith.mulf %57, %58 : vector<8x128xf32>
    %c16777215_i32_11 = arith.constant 16777215 : i32
    %60 = vector.broadcast %c16777215_i32_11 : i32 to vector<8x128xi32>
    %61 = arith.andi %52, %60 : vector<8x128xi32>
    %62 = arith.sitofp %61 : vector<8x128xi32> to vector<8x128xf32>
    %cst_12 = arith.constant 5.000000e-01 : f32
    %63 = vector.broadcast %cst_12 : f32 to vector<8x128xf32>
    %64 = arith.addf %62, %63 : vector<8x128xf32>
    %cst_13 = arith.constant 5.96046448E-8 : f32
    %65 = vector.broadcast %cst_13 : f32 to vector<8x128xf32>
    %66 = arith.mulf %64, %65 : vector<8x128xf32>
    %67 = math.log %59 : vector<8x128xf32>
    %cst_14 = arith.constant -2.000000e+00 : f32
    %68 = vector.broadcast %cst_14 : f32 to vector<8x128xf32>
    %69 = arith.mulf %68, %67 : vector<8x128xf32>
    %70 = math.sqrt %69 : vector<8x128xf32>
    %cst_15 = arith.constant 6.28318548 : f32
    %71 = vector.broadcast %cst_15 : f32 to vector<8x128xf32>
    %72 = arith.mulf %71, %66 : vector<8x128xf32>
    %73 = math.cos %72 : vector<8x128xf32>
    %74 = arith.mulf %70, %73 : vector<8x128xf32>
    %75 = math.sin %72 : vector<8x128xf32>
    %76 = arith.mulf %70, %75 : vector<8x128xf32>
    %77 = tpu.concatenate %74, %76 in 1 : vector<8x128xf32>, vector<8x128xf32> -> vector<8x256xf32>
    %c0_16 = arith.constant 0 : index
    %c0_17 = arith.constant 0 : index
    %78 = vector.load %arg2[%c0_16, %c0_17] : memref<8x256xf32, #tpu.memory_space<vmem>>, vector<8x256xf32>
    %cst_18 = arith.constant 1.000000e-01 : f32
    %79 = vector.broadcast %cst_18 : f32 to vector<8x256xf32>
    %80 = arith.mulf %77, %79 : vector<8x256xf32>
    %81 = arith.addf %78, %80 : vector<8x256xf32>
    %c0_19 = arith.constant 0 : index
    %c0_20 = arith.constant 0 : index
    %82 = vector.load %arg3[%c0_19, %c0_20] : memref<8x256xf32, #tpu.memory_space<vmem>>, vector<8x256xf32>
    tpu.vector_store %arg3[%c0_19, %c0_20], %81 {strides = array<i32>} : memref<8x256xf32, #tpu.memory_space<vmem>>, vector<8x256xf32>,
    return
  }
  func.func @transform_0(%arg0: i32, %arg1: memref<1xi32, #tpu.memory_space<smem>>) -> (i32, i32) {
    %c0_i32 = arith.constant 0 : i32
    %c0_i32_0 = arith.constant 0 : i32
    return %arg0, %c0_i32 : i32, i32
  }
  func.func @transform_1(%arg0: i32, %arg1: memref<1xi32, #tpu.memory_space<smem>>) -> (i32, i32) {
    %c0_i32 = arith.constant 0 : i32
    %c0_i32_0 = arith.constant 0 : i32
    return %arg0, %c0_i32 : i32, i32
  }
}

</mosaic_0001>

<llo_original>
// kernel: tpu_custom_call.1
$region0: #{tpu_custom_call.1}
  #allocation0 [shape = 'u32[]', space=smem, size = 0x4, offset = 0x4, fixed_abs, tag = 'smem constant byte address 0x4 - core index']
  #allocation1 [shape = 'u32[144,128]{1,0:T(1,128)}', space=vmem, size = 0x12000, scoped, tag = 'internal scratch']
  #allocation2 [shape = 's32[1]{0}', space=sflag, size = 0x4, scoped, tag = 'scoped memory for tpu_custom_call.1']
  #allocation3 [shape = 's32[1]{0:T(128)S(6)}', space=smem, size = 0x200, scoped, tag = 'prefetched SMEM operand 0']
  %s0 = inlined_call_operand.<no memory space> [shape: s32[1], index: 0, kind: input, shape index: {}]
  %s1 = inlined_call_operand.hbm [shape: f32[8,256], index: 1, kind: input, shape index: {}]
  %s2 = inlined_call_operand.hbm [shape: f32[8,256], index: 2, kind: output, shape index: {}]
  %s3 = sld [smem:[#allocation0]]
  $region18: #{tpu_custom_call.1} parent=0
    _
  %s5 = ssub.s32 1, %s3
  %s6 = scalar_select 0, %s5, %s3
  %7 = sst [smem:[#allocation3]] %s0
  $region1: #{tpu_custom_call.1} parent=0
    #allocation4 [shape = 'u8[8192]{0}', space=vmem, size = 0x2000, scoped, tag = 'input window, operand 1, single buffered']
    #allocation5 [shape = 's32[1]{0}', space=sflag, size = 0x4, scoped, tag = 'scoped memory for tpu_custom_call.1']
    #allocation6 [shape = 's32[1]{0}', space=sflag, size = 0x4, scoped, tag = 'scoped memory for tpu_custom_call.1']
    #allocation7 [shape = 'u8[8192]{0}', space=vmem, size = 0x2000, scoped, tag = 'output window, operand 0, single buffered']
    %8 = vsyncpa [#allocation5], 0
    %9 = vsyncpa [#allocation6], 0
    // Predicated region
    $region2: #{tpu_custom_call.1} parent=1 // pred_check
      _
    $region3: #{tpu_custom_call.1} parent=1 // pred_check_branch
      %11 = sbr.rel (0) target = $region5
    $region4: #{tpu_custom_call.1} parent=1 // pred_region
      %s13 = ssub.s32 256, 256
      %14 = vsyncadd [#allocation5], %s13
      %s16 = sshll.u32 [#allocation4], 4
      %s17 = int_to_ptr.vmem [resolvable:$true] %s16
      %19 = dma.hbm_to_vmem [thread:$0]  %s1, 256, %s17, [#allocation5]
    $region5: #{tpu_custom_call.1} parent=1 // pred_fallthru
      _
    // Predicated region
    $region6: #{tpu_custom_call.1} parent=1 // pred_check
      _
    $region7: #{tpu_custom_call.1} parent=1 // pred_check_branch
      %21 = sbr.rel (0) target = $region9
    $region8: #{tpu_custom_call.1} parent=1 // pred_region
      %22 = dma.done [#allocation5], 256
    $region9: #{tpu_custom_call.1} parent=1 // pred_fallthru
      _
    %s23 = smul.u32 0, 8
    %s24 = sld [smem:[#allocation3]]
    %s25 = smul.u32 %s24, 2654435769
    %s26 = sadd.s32 %s25, 2135587861
    %v27 = vlaneseq
    %v28 = vshrl.u32 %v27, 7
    %v29 = vlaneseq
    %v30 = vand.u32 %v29, 127
    %v31 = vstv %s23
    %v32 = vadd.s32 %v31, %v28
    %v33 = vmul.u32 %v32, 256
    %v34 = vadd.s32 %v33, %v30
    %v35 = vstv %s26
    %v36 = vxor.u32 %v34, %v35
    %v37 = vshra.s32 %v36, 16
    %v38 = vand.u32 %v37, 65535
    %v39 = vxor.u32 %v36, %v38
    %v40 = vmul.u32 %v39, 2146121005
    %v41 = vshra.s32 %v40, 15
    %v42 = vand.u32 %v41, 131071
    %v43 = vxor.u32 %v40, %v42
    %v44 = vmul.u32 %v43, 2221713035
    %v45 = vshra.s32 %v44, 16
    %v46 = vand.u32 %v45, 65535
    %v47 = vxor.u32 %v44, %v46
    %v48 = vxor.u32 %v47, 1759714724
    %v49 = vshra.s32 %v48, 16
    %v50 = vand.u32 %v49, 65535
    %v51 = vxor.u32 %v48, %v50
    %v52 = vmul.u32 %v51, 2146121005
    %v53 = vshra.s32 %v52, 15
    %v54 = vand.u32 %v53, 131071
    %v55 = vxor.u32 %v52, %v54
    %v56 = vmul.u32 %v55, 2221713035
    %v57 = vshra.s32 %v56, 16
    %v58 = vand.u32 %v57, 65535
    %v59 = vxor.u32 %v56, %v58
    %v60 = vand.u32 %v47, 16777215
    %v61 = vcvt.s32.f32 %v60
    %v62 = vadd.f32 %v61, 0.5
    %v63 = vmul.f32 %v62, 5.9604645e-08
    %v64 = vand.u32 %v59, 16777215
    %v65 = vcvt.s32.f32 %v64
    %v66 = vadd.f32 %v65, 0.5
    %v67 = vmul.f32 %v66, 5.9604645e-08
    %v68 = vlog2.pop %v63
    %v69 = vmul.f32 %v68, 0.6931472
    %v70 = vmul.f32 %v69, -2.0
    %v71 = vrsqrt.pop %v70
    %v72 = vmul.f32 %v70, %v71
    %vm73 = vcmp.eq.f32.partialorder %v70, inf
    %v74 = vsel %vm73, %v70, %v72
    %vm75 = vcmp.eq.f32.partialorder %v70, 0.0
    %v76 = vand.u32 %v70, 2147483648
    %v77 = vsel %vm75, %v76, %v74
    %v78 = vmul.f32 %v67, 6.2831855
    %v79 = vand.u32 2147483647, %v78
    %vm80 = vcmp.le.f32.partialorder %v79, 0.7853982
    %vm81 = vcmp.lt.s32.totalorder %v78, 0
    %v82 = vand.u32 %v78, 2139095040
    %v83 = vshrl.u32 %v82, 23
    %v84 = vsub.s32 %v83, 127
    %v85 = vand.u32 2147483647, %v78
    %v86 = vand.u32 %v85, 8388607
    %v87 = vor.u32 %v86, 8388608
    %v88 = vsub.s32 0, %v87
    %v89 = vadd.s32 %v84, 1
    %vm90 = vcmp.gt.s32.totalorder %v89, 0
    %v91 = vsel %vm90, %v89, 0
    %v92 = vshrl.u32 %v91, 5
    %v93 = vand.u32 %v91, 31
    %v94 = vsub.s32 32, %v93
    %v95 = vshrl.u32 683565275, %v94
    %v96 = vshll.u32 683565275, %v93
    %v97 = vshrl.u32 2475754826, %v94
    %v98 = vor.u32 %v96, %v97
    %v99 = vshll.u32 2475754826, %v93
    %v100 = vshrl.u32 2131351028, %v94
    %v101 = vor.u32 %v99, %v100
    %v102 = vshll.u32 2131351028, %v93
    %v103 = vshrl.u32 2102212464, %v94
    %v104 = vor.u32 %v102, %v103
    %v105 = vshll.u32 2102212464, %v93
    %v106 = vshrl.u32 920167782, %v94
    %v107 = vor.u32 %v105, %v106
    %v108 = vshll.u32 920167782, %v93
    %v109 = vshrl.u32 1326507024, %v94
    %v110 = vor.u32 %v108, %v109
    %vm111 = vcmp.lt.s32.totalorder %v92, 1
    %vm112 = vcmp.lt.s32.totalorder %v92, 2
    %vm113 = vcmp.lt.s32.totalorder %v92, 3
    %vm114 = vcmp.lt.s32.totalorder %v92, 4
    %v115 = vsel %vm111, %v95, %v98
    %v116 = vsel %vm114, %v104, 2102212464
    %v117 = vsel %vm113, %v101, %v116
    %v118 = vsel %vm112, %v115, %v117
    %v119 = vsel %vm111, %v98, %v101
    %v120 = vsel %vm114, %v107, 920167782
    %v121 = vsel %vm113, %v104, %v120
    %v122 = vsel %vm112, %v119, %v121
    %v123 = vsel %vm111, %v101, %v104
    %v124 = vsel %vm114, %v110, 1326507024
    %v125 = vsel %vm113, %v107, %v124
    %v126 = vsel %vm112, %v123, %v125
    %v127 = vshll.u32 %v87, 8
    %v128 = vmul.u32.u64.compose %v127, %v126
    %v129 = vextract.low.u32 %v128
    %v130 = vextract.high.u32 %v128
    %v131 = vmul.u32.u64.compose %v127, %v122
    %v132 = vextract.low.u32 %v131
    %v133 = vextract.high.u32 %v131
    %v134 = vmul.u32 %v127, %v118
    %v135 = vadd.s32 %v130, %v132
    %vm136 = vc.u32 %v130, %v132
    %v137 = vadd.s32 %v133, 1
    %v138 = vsel %vm136, %v137, %v133
    %v139 = vadd.s32 %v134, %v138
    %v140 = vadd.s32 %v139, 536870912
    %v141 = vshrl.u32 %v140, 30
    %v142 = vshll.u32 %v141, 30
    %v143 = vsub.s32 %v139, %v142
    %vm144 = vcmp.lt.s32.totalorder %v143, 0
    %v145 = vsub.s32 0, %v143
    %v146 = vsel %vm144, %v145, %v143
    %v147 = vclz %v146
    %v148 = vsub.s32 %v147, 2
    %vm149 = vcmp.gt.s32.totalorder 0, %v148
    %v150 = vsel %vm149, 0, %v148
    %v151 = vsub.s32 32, %v150
    %v152 = vshll.u32 %v143, %v150
    %v153 = vshrl.u32 %v135, %v151
    %v154 = vor.u32 %v152, %v153
    %v155 = vsub.s32 4294967266, %v150
    %v156 = vadd.s32 %v155, 127
    %v157 = vshll.u32 %v156, 23
    %v158 = vor.u32 4788187, %v157
    %v159 = vand.u32 2147483647, %v158
    %v161 = vcvt.s32.f32 %v154
    %v162 = vmul.f32 %v161, %v159
    %v163 = vxor.u32 %v162, 2147483648
    %v164 = vsel %vm81, %v163, %v162
    %v165 = vsub.s32 4, %v141
    %v166 = vsel %vm81, %v165, %v141
    %v167 = vsel %vm80, %v78, %v164
    %v168 = vsel %vm80, 0, %v166
    %v169 = vcosq.f32.pop %v167
    %v170 = vsinq.f32.pop %v167
    %vm171 = vweird.f32 %v78
    %v172 = vand.u32 %v168, 3
    %vm173 = vcmp.lt.s32.totalorder %v172, 2
    %vm174 = vcmp.eq.s32.totalorder %v172, 0
    %v175 = vxor.u32 %v170, 2147483648
    %v176 = vsel %vm174, %v169, %v175
    %vm177 = vcmp.eq.s32.totalorder %v172, 2
    %v178 = vxor.u32 %v169, 2147483648
    %v179 = vsel %vm177, %v178, %v170
    %v180 = vsel %vm173, %v176, %v179
    %v181 = vsel %vm171, nan, %v180
    %v182 = vmul.f32 %v77, %v181
    %v183 = vand.u32 2147483647, %v78
    %vm184 = vcmp.le.f32.partialorder %v183, 0.7853982
    %vm185 = vcmp.lt.s32.totalorder %v78, 0
    %v186 = vand.u32 %v78, 2139095040
    %v187 = vshrl.u32 %v186, 23
    %v188 = vsub.s32 %v187, 127
    %v189 = vand.u32 2147483647, %v78
    %v190 = vand.u32 %v189, 8388607
    %v191 = vor.u32 %v190, 8388608
    %v192 = vsub.s32 0, %v191
    %v193 = vadd.s32 %v188, 1
    %vm194 = vcmp.gt.s32.totalorder %v193, 0
    %v195 = vsel %vm194, %v193, 0
    %v196 = vshrl.u32 %v195, 5
    %v197 = vand.u32 %v195, 31
    %v198 = vsub.s32 32, %v197
    %v199 = vshrl.u32 683565275, %v198
    %v200 = vshll.u32 683565275, %v197
    %v201 = vshrl.u32 2475754826, %v198
    %v202 = vor.u32 %v200, %v201
    %v203 = vshll.u32 2475754826, %v197
    %v204 = vshrl.u32 2131351028, %v198
    %v205 = vor.u32 %v203, %v204
    %v206 = vshll.u32 2131351028, %v197
    %v207 = vshrl.u32 2102212464, %v198
    %v208 = vor.u32 %v206, %v207
    %v209 = vshll.u32 2102212464, %v197
    %v210 = vshrl.u32 920167782, %v198
    %v211 = vor.u32 %v209, %v210
    %v212 = vshll.u32 920167782, %v197
    %v213 = vshrl.u32 1326507024, %v198
    %v214 = vor.u32 %v212, %v213
    %vm215 = vcmp.lt.s32.totalorder %v196, 1
    %vm216 = vcmp.lt.s32.totalorder %v196, 2
    %vm217 = vcmp.lt.s32.totalorder %v196, 3
    %vm218 = vcmp.lt.s32.totalorder %v196, 4
    %v219 = vsel %vm215, %v199, %v202
    %v220 = vsel %vm218, %v208, 2102212464
    %v221 = vsel %vm217, %v205, %v220
    %v222 = vsel %vm216, %v219, %v221
    %v223 = vsel %vm215, %v202, %v205
    %v224 = vsel %vm218, %v211, 920167782
    %v225 = vsel %vm217, %v208, %v224
    %v226 = vsel %vm216, %v223, %v225
    %v227 = vsel %vm215, %v205, %v208
    %v228 = vsel %vm218, %v214, 1326507024
    %v229 = vsel %vm217, %v211, %v228
    %v230 = vsel %vm216, %v227, %v229
    %v231 = vshll.u32 %v191, 8
    %v232 = vmul.u32.u64.compose %v231, %v230
    %v233 = vextract.low.u32 %v232
    %v234 = vextract.high.u32 %v232
    %v235 = vmul.u32.u64.compose %v231, %v226
    %v236 = vextract.low.u32 %v235
    %v237 = vextract.high.u32 %v235
    %v238 = vmul.u32 %v231, %v222
    %v239 = vadd.s32 %v234, %v236
    %vm240 = vc.u32 %v234, %v236
    %v241 = vadd.s32 %v237, 1
    %v242 = vsel %vm240, %v241, %v237
    %v243 = vadd.s32 %v238, %v242
    %v244 = vadd.s32 %v243, 536870912
    %v245 = vshrl.u32 %v244, 30
    %v246 = vshll.u32 %v245, 30
    %v247 = vsub.s32 %v243, %v246
    %vm248 = vcmp.lt.s32.totalorder %v247, 0
    %v249 = vsub.s32 0, %v247
    %v250 = vsel %vm248, %v249, %v247
    %v251 = vclz %v250
    %v252 = vsub.s32 %v251, 2
    %vm253 = vcmp.gt.s32.totalorder 0, %v252
    %v254 = vsel %vm253, 0, %v252
    %v255 = vsub.s32 32, %v254
    %v256 = vshll.u32 %v247, %v254
    %v257 = vshrl.u32 %v239, %v255
    %v258 = vor.u32 %v256, %v257
    %v259 = vsub.s32 4294967266, %v254
    %v260 = vadd.s32 %v259, 127
    %v261 = vshll.u32 %v260, 23
    %v262 = vor.u32 4788187, %v261
    %v263 = vand.u32 2147483647, %v262
    %v265 = vcvt.s32.f32 %v258
    %v266 = vmul.f32 %v265, %v263
    %v267 = vxor.u32 %v266, 2147483648
    %v268 = vsel %vm185, %v267, %v266
    %v269 = vsub.s32 4, %v245
    %v270 = vsel %vm185, %v269, %v245
    %v271 = vsel %vm184, %v78, %v268
    %v272 = vsel %vm184, 0, %v270
    %v273 = vcosq.f32.pop %v271
    %v274 = vsinq.f32.pop %v271
    %vm275 = vweird.f32 %v78
    %v276 = vadd.s32 %v272, 3
    %v277 = vand.u32 %v276, 3
    %vm278 = vcmp.lt.s32.totalorder %v277, 2
    %vm279 = vcmp.eq.s32.totalorder %v277, 0
    %v280 = vxor.u32 %v274, 2147483648
    %v281 = vsel %vm279, %v273, %v280
    %vm282 = vcmp.eq.s32.totalorder %v277, 2
    %v283 = vxor.u32 %v273, 2147483648
    %v284 = vsel %vm282, %v283, %v274
    %v285 = vsel %vm278, %v281, %v284
    %v286 = vsel %vm275, nan, %v285
    %v287 = vmul.f32 %v77, %v286
    %v288 = vld [vmem:[#allocation4] sm:$0xff]
    %v289 = vld [vmem:[#allocation4 + $0x8] sm:$0xff]
    %v290 = vmul.f32 %v182, 0.1
    %v291 = vmul.f32 %v287, 0.1
    %v292 = vadd.f32 %v288, %v290
    %v293 = vadd.f32 %v289, %v291
    %294 = vst [vmem:[#allocation7] sm:$0xff] %v292
    %295 = vst [vmem:[#allocation7 + $0x8] sm:$0xff] %v293
    // Predicated region
    $region10: #{tpu_custom_call.1} parent=1 // pred_check
      _
    $region11: #{tpu_custom_call.1} parent=1 // pred_check_branch
      %297 = sbr.rel (0) target = $region13
    $region12: #{tpu_custom_call.1} parent=1 // pred_region
      %s299 = ssub.s32 256, 256
      %300 = vsyncadd [#allocation6], %s299
      %s302 = sshll.u32 [#allocation7], 4
      %s303 = int_to_ptr.vmem [resolvable:$true] %s302
      %305 = dma.vmem_to_hbm [thread:$0]  %s303, 256, %s2, [#allocation6]
    $region13: #{tpu_custom_call.1} parent=1 // pred_fallthru
      _
    // Predicated region
    $region14: #{tpu_custom_call.1} parent=1 // pred_check
      _
    $region15: #{tpu_custom_call.1} parent=1 // pred_check_branch
      %307 = sbr.rel (0) target = $region17
    $region16: #{tpu_custom_call.1} parent=1 // pred_region
      %308 = dma.done [#allocation6], 256
    $region17: #{tpu_custom_call.1} parent=1 // pred_fallthru
      _
    %309 = vsyncpa [#allocation5], 1
    %310 = vsyncpa [#allocation6], 1

</llo_original>
